<compile_context>
chip_gen: v6e
topology: v6e:2x2x1
jax: 0.10.0
libtpu: 0.0.40
codegen_flags: <defaults>
</compile_context>

<pallas_src>
import math
from typing import Optional, Tuple

import numpy as np
import jax
import jax.numpy as jnp
from jax import lax
from jax.experimental import pallas as pl
from jax.experimental.pallas import tpu as pltpu


def init_idct_kernel(n_dct: int, dtype=jnp.float32) -> jnp.ndarray:
    """iV_fq = scipy.fft.dct(np.eye(n_dct), type=2, norm='ortho') without scipy.

    iV_fq[f, q] = s(q) * cos(pi * q * (2f + 1) / (2 n_dct)),
    s(0) = sqrt(1/n_dct), s(q>0) = sqrt(2/n_dct).   Shape (n_dct, n_dct).
    Pass dtype=jnp.bfloat16 to build the (orthonormal) basis in bf16 once at init.
    """
    f = np.arange(n_dct)[:, None].astype(np.float64)   # row: output index of F.linear
    q = np.arange(n_dct)[None, :].astype(np.float64)   # col: DCT coefficient index
    mat = np.cos(np.pi * q * (2.0 * f + 1.0) / (2.0 * n_dct))
    scale = np.full((1, n_dct), math.sqrt(2.0 / n_dct))
    scale[0, 0] = math.sqrt(1.0 / n_dct)
    return jnp.asarray((mat * scale).astype(np.float32)).astype(dtype)


# ----------------------------- kernel bodies ------------------------------ #

def _idct_rows_kernel(x_ref, w_ref, o_ref):
    # o[TM, n_dct] = x[TM, K] @ w[n_dct, K]^T     (used when n_dct >= 128)
    a = x_ref[...].astype(w_ref.dtype)             # in-kernel cast (VPU), no extra HBM pass
    o_ref[...] = lax.dot_general(
        a, w_ref[...],
        dimension_numbers=(((1,), (1,)), ((), ())),
        preferred_element_type=jnp.float32,
    ).astype(o_ref.dtype)


def _idct_cols_kernel(x_ref, w_ref, o_ref):
    # o[n_dct, TM] = w[n_dct, K] @ x[TM, K]^T     (lane-dense output when n_dct < 128)
    a = x_ref[...].astype(w_ref.dtype)
    o_ref[...] = lax.dot_general(
        w_ref[...], a,
        dimension_numbers=(((1,), (1,)), ((), ())),
        preferred_element_type=jnp.float32,
    ).astype(o_ref.dtype)


# ------------------------------- wrapper ---------------------------------- #

_VMEM_BUDGET = 24 * 1024 * 1024   # fits under v7x's 32 MiB scoped default with headroom


def _round_up(x: int, m: int) -> int:
    return ((x + m - 1) // m) * m


def _auto_tm(m: int, n_dct: int, in_bytes: int, out_bytes: int,
             w_bytes: int, align: int) -> int:
    """Pick the row tile: as big as fits ~24 MiB VMEM, >= 2 grid steps if possible."""
    tm = 8192
    while tm > 256 and 2 * tm * n_dct * (in_bytes + out_bytes) + 2 * w_bytes > _VMEM_BUDGET:
        tm //= 2
    # Keep at least 2 grid steps when there is enough work (v7x: 2 TensorCores
    # shard the "parallel" grid axis).
    while tm > 256 and -(-m // tm) < 2:
        tm //= 2
    return max(align, min(tm, _round_up(m, align)))


def linear_idct(x__q: jnp.ndarray,
                iV_fq: jnp.ndarray,
                q_range_idx: Optional[Tuple[int, int]] = None,
                *,
                tm: Optional[int] = None,
                compute_dtype=None,
                min_pallas_rows: int = 128) -> jnp.ndarray:
    """Pallas equivalent of LinearIDCT.forward(x__q, q_range_idx).

    compute_dtype: dtype fed to the MXU (f32 accumulation always). Defaults to
    x__q.dtype, so f32 inputs reproduce the PyTorch module exactly and bf16
    inputs halve HBM traffic.
    """
    n_dct = iV_fq.shape[0]
    assert iV_fq.shape == (n_dct, n_dct)
    assert x__q.shape[-1] == n_dct
    q0, q1 = q_range_idx or (0, n_dct)
    assert 0 <= q0 <= q1 <= n_dct

    out_dtype = x__q.dtype
    compute_dtype = jnp.dtype(compute_dtype if compute_dtype is not None else x__q.dtype)

    # q-range via zeroed weight columns: mathematically identical to slicing
    # (zeros contribute exactly 0) and keeps block shapes / x reads independent
    # of the q range -> no materialized x slice in HBM.
    w = iV_fq
    if (q0, q1) != (0, n_dct):
        qmask = (np.arange(n_dct) >= q0) & (np.arange(n_dct) < q1)
        w = jnp.where(jnp.asarray(qmask)[None, :], w, jnp.zeros((), w.dtype))
    w = w.astype(compute_dtype)          # no-op if iV_fq was built in compute_dtype

    lead = x__q.shape[:-1]
    m = int(np.prod(lead)) if lead else 1

    # Tiny problems: a single fused XLA dot beats kernel launch + grid overhead.
    if m < min_pallas_rows:
        y = jnp.einsum("...q,fq->...f", x__q.astype(compute_dtype), w,
                       preferred_element_type=jnp.float32)
        return y.astype(out_dtype)

    x2 = x__q.reshape(m, n_dct)          # merges contiguous leading dims (no copy)

    transposed_out = n_dct < 128         # lane-dense output layout for small n_dct
    align = 128 if transposed_out else 8
    in_b = jnp.dtype(x2.dtype).itemsize
    out_b = jnp.dtype(out_dtype).itemsize
    w_bytes = n_dct * n_dct * jnp.dtype(compute_dtype).itemsize

    if tm is None:
        tm = _auto_tm(m, n_dct, in_b, out_b, w_bytes, align)
    else:
        tm = max(align, min(_round_up(tm, align), _round_up(m, align)))

    grid = (pl.cdiv(m, tm),)             # ragged last tile: Pallas masks the edge writes
    est_vmem = 2 * tm * n_dct * (in_b + out_b) + 2 * w_bytes
    vmem_limit = min(64 * 1024 * 1024, max(32 * 1024 * 1024, 2 * est_vmem))

    x_spec = pl.BlockSpec((tm, n_dct), lambda i: (i, 0))
    # Constant index_map -> the weight tile is DMA'd once and re-used every step.
    # (pl.Buffered(1) could halve its VMEM footprint for very large n_dct; left at
    #  the default double buffer for portability -- it is tiny here.)
    w_spec = pl.BlockSpec((n_dct, n_dct), lambda i: (0, 0))

    if transposed_out:
        kernel = _idct_cols_kernel
        out_shape = jax.ShapeDtypeStruct((n_dct, m), out_dtype)
        out_spec = pl.BlockSpec((n_dct, tm), lambda i: (0, i))
    else:
        kernel = _idct_rows_kernel
        out_shape = jax.ShapeDtypeStruct((m, n_dct), out_dtype)
        out_spec = pl.BlockSpec((tm, n_dct), lambda i: (i, 0))

    out = pl.pallas_call(
        kernel,
        out_shape=out_shape,
        grid_spec=pltpu.PrefetchScalarGridSpec(
            num_scalar_prefetch=0,
            grid=grid,
            in_specs=[x_spec, w_spec],
            out_specs=out_spec,
        ),
        compiler_params=pltpu.CompilerParams(
            dimension_semantics=("parallel",),
            vmem_limit_bytes=vmem_limit,
        ),
    )(x2, w)

    if transposed_out:
        out = out.T                      # layout plumbing only; keeps (..., n_dct) API
    return out.reshape(*lead, n_dct)


# --------------------------------- demo ----------------------------------- #

if __name__ == "__main__":
    n_dct = 16
    key = jax.random.PRNGKey(0)
    k1, k2 = jax.random.split(key)

    iV_fq = init_idct_kernel(n_dct)

    # (batch=2, channels=4, seq=16, n_dct=16)  ->  M = 128 rows, goes through Pallas.
    x = jax.random.normal(k1, (2, 4, 16, n_dct), dtype=jnp.float32)

    # 1) Full-range IDCT, f32 compute (exact semantics of forward(x)).
    y = jax.block_until_ready(linear_idct(x, iV_fq))
    y_ref = jnp.einsum("...q,fq->...f", x, iV_fq)
    assert y.shape == x.shape
    np.testing.assert_allclose(np.asarray(y), np.asarray(y_ref), rtol=1e-5, atol=1e-5)

    # 2) q_range_idx path: forward(x, (2, 10)).
    y2 = jax.block_until_ready(linear_idct(x, iV_fq, q_range_idx=(2, 10)))
    y2_ref = jnp.einsum("...q,fq->...f", x[..., 2:10], iV_fq[:, 2:10])
    np.testing.assert_allclose(np.asarray(y2), np.asarray(y2_ref), rtol=1e-5, atol=1e-5)

    # 3) bf16 MXU operands + a multi-step grid (M = 512, tm = 256 -> 2 grid steps).
    xb = jax.random.normal(k2, (2, 256, n_dct), dtype=jnp.float32)
    y3 = jax.block_until_ready(
        linear_idct(xb, iV_fq, tm=256, compute_dtype=jnp.bfloat16))
    y3_ref = jnp.einsum("...q,fq->...f", xb, iV_fq)
    np.testing.assert_allclose(np.asarray(y3), np.asarray(y3_ref), rtol=5e-2, atol=1e-1)

    print("KERNEL_OK")
</pallas_src>

<mosaic_0001>
module attributes {stable_mosaic.version = 11 : i64} {
  func.func @_idct_cols_kernel(%arg0: i32, %arg1: memref<128x16xf32, #tpu.memory_space<vmem>>, %arg2: memref<16x16xf32, #tpu.memory_space<vmem>>, %arg3: memref<16x128xf32, #tpu.memory_space<vmem>>) attributes {dimension_semantics = [#tpu.dimension_semantics<parallel>], iteration_bounds = array<i64: 1>, scalar_prefetch = 0 : i64, scratch_operands = 0 : i64, tpu.core_type = #tpu.core_type<tc>, window_params = [{transform_indices = @transform_0, window_bounds = array<i64: 128, 16>}, {pipeline_mode = #tpu.pipeline_mode<synchronous>, transform_indices = @transform_1, window_bounds = array<i64: 16, 16>}, {transform_indices = @transform_2, window_bounds = array<i64: 16, 128>}]} {
    %c0 = arith.constant 0 : index
    %c0_0 = arith.constant 0 : index
    %0 = vector.load %arg1[%c0, %c0_0] : memref<128x16xf32, #tpu.memory_space<vmem>>, vector<128x16xf32>
    %c0_1 = arith.constant 0 : index
    %c0_2 = arith.constant 0 : index
    %1 = vector.load %arg2[%c0_1, %c0_2] : memref<16x16xf32, #tpu.memory_space<vmem>>, vector<16x16xf32>
    %cst = arith.constant dense<0.000000e+00> : vector<16x128xf32>
    %2 = tpu.matmul %1, %0, %cst {dimension_numbers = #tpu.dot_dimension_numbers<[1], [1], [0], [0], [0, 0, 1, 0], [], []>} : vector<16x16xf32>, vector<128x16xf32>, vector<16x128xf32> -> vector<16x128xf32>
    %c0_3 = arith.constant 0 : index
    %c0_4 = arith.constant 0 : index
    %3 = vector.load %arg3[%c0_3, %c0_4] : memref<16x128xf32, #tpu.memory_space<vmem>>, vector<16x128xf32>
    tpu.vector_store %arg3[%c0_3, %c0_4], %2 {strides = array<i32>} : memref<16x128xf32, #tpu.memory_space<vmem>>, vector<16x128xf32>,
    return
  }
  func.func @transform_0(%arg0: i32) -> (i32, i32) {
    %c0_i32 = arith.constant 0 : i32
    %c0_i32_0 = arith.constant 0 : i32
    return %arg0, %c0_i32 : i32, i32
  }
  func.func @transform_1(%arg0: i32) -> (i32, i32) {
    %c0_i32 = arith.constant 0 : i32
    %c0_i32_0 = arith.constant 0 : i32
    %c0_i32_1 = arith.constant 0 : i32
    return %c0_i32, %c0_i32_0 : i32, i32
  }
  func.func @transform_2(%arg0: i32) -> (i32, i32) {
    %c0_i32 = arith.constant 0 : i32
    %c0_i32_0 = arith.constant 0 : i32
    return %c0_i32, %arg0 : i32, i32
  }
}

</mosaic_0001>

<llo_original>
// kernel: tpu_custom_call.1
$region0: #{tpu_custom_call.1}
  #allocation0 [shape = 'u32[]', space=smem, size = 0x4, offset = 0x4, fixed_abs, tag = 'smem constant byte address 0x4 - core index']
  #allocation1 [shape = 'u32[144,128]{1,0:T(1,128)}', space=vmem, size = 0x12000, scoped, tag = 'internal scratch']
  %s0 = inlined_call_operand.vmem [shape: f32[128,16], index: 0, kind: input, shape index: {}]
  %s1 = inlined_call_operand.vmem [shape: f32[16,16], index: 1, kind: input, shape index: {}]
  %s2 = inlined_call_operand.hbm [shape: f32[16,128], index: 2, kind: output, shape index: {}]
  %s3 = sld [smem:[#allocation0]]
  $region18: #{tpu_custom_call.1} parent=0
    _
  %s5 = ssub.s32 1, %s3
  %s6 = scalar_select 0, %s5, %s3
  $region1: #{tpu_custom_call.1} parent=0
    #allocation2 [shape = 'u8[8192]{0}', space=vmem, size = 0x2000, scoped, tag = 'output window, operand 0, single buffered']
    #allocation3 [shape = 's32[1]{0}', space=sflag, size = 0x4, scoped, tag = 'scoped memory for tpu_custom_call.1']
    %7 = vsyncpa [#allocation3], 0
    // Predicated region
    $region2: #{tpu_custom_call.1} parent=1 // pred_check
      _
    $region3: #{tpu_custom_call.1} parent=1 // pred_check_branch
      %9 = sbr.rel (0) target = $region5
    $region4: #{tpu_custom_call.1} parent=1 // pred_region
      _
    $region5: #{tpu_custom_call.1} parent=1 // pred_fallthru
      _
    // Predicated region
    $region6: #{tpu_custom_call.1} parent=1 // pred_check
      _
    $region7: #{tpu_custom_call.1} parent=1 // pred_check_branch
      %11 = sbr.rel (0) target = $region9
    $region8: #{tpu_custom_call.1} parent=1 // pred_region
      _
    $region9: #{tpu_custom_call.1} parent=1 // pred_fallthru
      _
    %v12 = vld [vmem:[%s0] sm:$0xff]
    %v13 = vld [vmem:[%s0 + $0x8] sm:$0xff]
    %v14 = vld [vmem:[%s0 + $0x10] sm:$0xff]
    %v15 = vld [vmem:[%s0 + $0x18] sm:$0xff]
    %v16 = vld [vmem:[%s0 + $0x20] sm:$0xff]
    %v17 = vld [vmem:[%s0 + $0x28] sm:$0xff]
    %v18 = vld [vmem:[%s0 + $0x30] sm:$0xff]
    %v19 = vld [vmem:[%s0 + $0x38] sm:$0xff]
    %v20 = vld [vmem:[%s0 + $0x40] sm:$0xff]
    %v21 = vld [vmem:[%s0 + $0x48] sm:$0xff]
    %v22 = vld [vmem:[%s0 + $0x50] sm:$0xff]
    %v23 = vld [vmem:[%s0 + $0x58] sm:$0xff]
    %v24 = vld [vmem:[%s0 + $0x60] sm:$0xff]
    %v25 = vld [vmem:[%s0 + $0x68] sm:$0xff]
    %v26 = vld [vmem:[%s0 + $0x70] sm:$0xff]
    %v27 = vld [vmem:[%s0 + $0x78] sm:$0xff]
    %v28 = vld [vmem:[%s1] sm:$0xff]
    %v29 = vld [vmem:[%s1 + $0x8] sm:$0xff]
    %vm30 = vcmask 130048
    %v32 = vsel %vm30, %v28, 0
    %v35 = vsel %vm30, %v29, 0
    %v38 = vsel %vm30, %v12, 0
    %v41 = vsel %vm30, %v13, 0
    %v44 = vsel %vm30, %v14, 0
    %v47 = vsel %vm30, %v15, 0
    %v50 = vsel %vm30, %v16, 0
    %v53 = vsel %vm30, %v17, 0
    %v56 = vsel %vm30, %v18, 0
    %v59 = vsel %vm30, %v19, 0
    %v62 = vsel %vm30, %v20, 0
    %v65 = vsel %vm30, %v21, 0
    %v68 = vsel %vm30, %v22, 0
    %v71 = vsel %vm30, %v23, 0
    %v74 = vsel %vm30, %v24, 0
    %v77 = vsel %vm30, %v25, 0
    %v80 = vsel %vm30, %v26, 0
    %v83 = vsel %vm30, %v27, 0
    %85 = vmatprep.subr.mxu0 0.0
    %86 = vmatpush1.xpose.msra.mxu0 %v83
    %87 = vmatprep.subr.mxu0 0.0
    %88 = vmatpush1.xpose.msra.mxu0 %v80
    %89 = vmatprep.subr.mxu0 0.0
    %90 = vmatpush1.xpose.msra.mxu0 %v77
    %91 = vmatprep.subr.mxu0 0.0
    %92 = vmatpush1.xpose.msra.mxu0 %v74
    %93 = vmatprep.subr.mxu0 0.0
    %94 = vmatpush1.xpose.msra.mxu0 %v71
    %95 = vmatprep.subr.mxu0 0.0
    %96 = vmatpush1.xpose.msra.mxu0 %v68
    %97 = vmatprep.subr.mxu0 0.0
    %98 = vmatpush1.xpose.msra.mxu0 %v65
    %99 = vmatprep.subr.mxu0 0.0
    %100 = vmatpush1.xpose.msra.mxu0 %v62
    %101 = vmatprep.subr.mxu0 0.0
    %102 = vmatpush1.xpose.msra.mxu0 %v59
    %103 = vmatprep.subr.mxu0 0.0
    %104 = vmatpush1.xpose.msra.mxu0 %v56
    %105 = vmatprep.subr.mxu0 0.0
    %106 = vmatpush1.xpose.msra.mxu0 %v53
    %107 = vmatprep.subr.mxu0 0.0
    %108 = vmatpush1.xpose.msra.mxu0 %v50
    %109 = vmatprep.subr.mxu0 0.0
    %110 = vmatpush1.xpose.msra.mxu0 %v47
    %111 = vmatprep.subr.mxu0 0.0
    %112 = vmatpush1.xpose.msra.mxu0 %v44
    %113 = vmatprep.subr.mxu0 0.0
    %114 = vmatpush1.xpose.msra.mxu0 %v41
    %115 = vmatprep.subr.mxu0 0.0
    %116 = vmatpush1.xpose.msra.mxu0 %v38
    %117 = vmatprep.subr.mxu0 0.0
    %118 = vmatpush2.xpose.msra.mxu0 0.0
    %119 = vmatprep.subr.mxu0 0.0
    %120 = vmatpush2.xpose.msra.mxu0 0.0
    %121 = vmatprep.subr.mxu0 0.0
    %122 = vmatpush2.xpose.msra.mxu0 0.0
    %123 = vmatprep.subr.mxu0 0.0
    %124 = vmatpush2.xpose.msra.mxu0 0.0
    %125 = vmatprep.subr.mxu0 0.0
    %126 = vmatpush2.xpose.msra.mxu0 0.0
    %127 = vmatprep.subr.mxu0 0.0
    %128 = vmatpush2.xpose.msra.mxu0 0.0
    %129 = vmatprep.subr.mxu0 0.0
    %130 = vmatpush2.xpose.msra.mxu0 0.0
    %131 = vmatprep.subr.mxu0 0.0
    %132 = vmatpush2.xpose.msra.mxu0 0.0
    %133 = vmatprep.subr.mxu0 0.0
    %134 = vmatpush2.xpose.msra.mxu0 0.0
    %135 = vmatprep.subr.mxu0 0.0
    %136 = vmatpush2.xpose.msra.mxu0 0.0
    %137 = vmatprep.subr.mxu0 0.0
    %138 = vmatpush2.xpose.msra.mxu0 0.0
    %139 = vmatprep.subr.mxu0 0.0
    %140 = vmatpush2.xpose.msra.mxu0 0.0
    %141 = vmatprep.subr.mxu0 0.0
    %142 = vmatpush2.xpose.msra.mxu0 0.0
    %143 = vmatprep.subr.mxu0 0.0
    %144 = vmatpush2.xpose.msra.mxu0 0.0
    %145 = vmatprep.subr.mxu0 0.0
    %146 = vmatpush2.xpose.msra.mxu0 0.0
    %147 = vmatprep.subr.mxu0 0.0
    %148 = vmatpush2.xpose.msra.mxu0 0.0
    %149 = vmatprep.mubr.f32.mxu0 0.0
    %150 = vmatmul.mubr.f32.gmra.mxu0 %v32
    %v151 = vpop.f32.mrf.mxu0
    %v152 = vadd.f32 0.0, %v151
    %v153 = vpop.f32.mrf.mxu0
    %154 = vmatprep.mubr.f32.mxu0 0.0
    %155 = vmatmul.mubr.f32.gmra.mxu0 %v35
    %v156 = vpop.f32.mrf.mxu0
    %v157 = vadd.f32 0.0, %v156
    %v158 = vpop.f32.mrf.mxu0
    %159 = vdwg.mxu0
    %160 = vst [vmem:[#allocation2] sm:$0xff] %v152
    %161 = vst [vmem:[#allocation2 + $0x8] sm:$0xff] %v157
    // Predicated region
    $region10: #{tpu_custom_call.1} parent=1 // pred_check
      _
    $region11: #{tpu_custom_call.1} parent=1 // pred_check_branch
      %163 = sbr.rel (0) target = $region13
    $region12: #{tpu_custom_call.1} parent=1 // pred_region
      %s165 = ssub.s32 256, 256
      %166 = vsyncadd [#allocation3], %s165
      %s167 = sshll.u32 [#allocation2], 4
      %s168 = int_to_ptr.vmem [resolvable:$true] %s167
      %173 = dma.vmem_to_hbm [thread:$0]  %s168, 256, %s2, [#allocation3], 128, 128, 8
    $region13: #{tpu_custom_call.1} parent=1 // pred_fallthru
      _
    // Predicated region
    $region14: #{tpu_custom_call.1} parent=1 // pred_check
      _
    $region15: #{tpu_custom_call.1} parent=1 // pred_check_branch
      %175 = sbr.rel (0) target = $region17
    $region16: #{tpu_custom_call.1} parent=1 // pred_region
      %176 = dma.done [#allocation3], 256
    $region17: #{tpu_custom_call.1} parent=1 // pred_fallthru
      _
    %177 = vsyncpa [#allocation3], 1

</llo_original>
